<compile_context>
chip_gen: v6e
topology: v6e:2x2x1
jax: 0.10.0
libtpu: 0.0.40
codegen_flags: <defaults>
</compile_context>

<pallas_src>
import functools

import jax
import jax.numpy as jnp
from jax.experimental import pallas as pl
from jax.experimental.pallas import tpu as pltpu

LANE = 128


def actor_kernel(x_ref, w1_ref, b1_ref, w2_ref, b2_ref, w3_ref, b3_ref, out_ref):
    # Layer 1: bf16 MXU matmul, f32 accumulate; bias + ReLU in f32 (v5e-safe).
    h1 = jnp.dot(x_ref[...], w1_ref[...], preferred_element_type=jnp.float32)
    h1 = jnp.maximum(h1 + b1_ref[...], 0.0)

    # Layer 2: Linear + ReLU
    h2 = jnp.dot(h1.astype(jnp.bfloat16), w2_ref[...],
                 preferred_element_type=jnp.float32)
    h2 = jnp.maximum(h2 + b2_ref[...], 0.0)

    # Layer 3: Linear -> logits over the lane-padded (128-wide) action axis.
    logits = jnp.dot(h2.astype(jnp.bfloat16), w3_ref[...],
                     preferred_element_type=jnp.float32) + b3_ref[...]

    # Numerically stable softmax over the last axis. Padded action lanes carry
    # a -1e30 bias, so exp underflows to 0 there and real lanes are exact.
    m = jnp.max(logits, axis=-1, keepdims=True)
    e = jnp.exp(logits - m)
    denom = jnp.sum(e, axis=-1, keepdims=True)
    probs = e * pl.reciprocal(denom, approx=True)   # divide -> EUP slot

    out_ref[...] = probs.astype(out_ref.dtype)


def _round_up(n, m):
    return ((n + m - 1) // m) * m


@functools.partial(jax.jit, static_argnames=("block_b",))
def actor_forward(x, w1, b1, w2, b2, w3, b3, *, block_b=256):
    """Full actor MLP + softmax in one pipelined Pallas kernel."""
    B, input_dims = x.shape
    n_actions = w3.shape[1]

    # Lane-dense action axis: pad to a multiple of 128 so the softmax
    # reductions and the output store use full, unmasked vregs.
    n_pad = _round_up(n_actions, LANE)
    pa = n_pad - n_actions
    w3p = jnp.pad(w3, ((0, 0), (0, pa)))
    b3p = jnp.pad(b3, ((0, 0), (0, pa)), constant_values=-1e30)

    # Batch tile: big enough to amortize ~0.35us/step overhead; sublane-aligned.
    tb = block_b if B >= block_b else _round_up(B, 8)
    Bp = _round_up(B, tb)
    xp = jnp.pad(x, ((0, Bp - B), (0, 0)))

    # bf16 MXU operands (single-pass matmul on v5e/v6e/v7x); f32 accumulation
    # is kept via preferred_element_type inside the kernel.
    xb = xp.astype(jnp.bfloat16)
    w1b = w1.astype(jnp.bfloat16)
    w2b = w2.astype(jnp.bfloat16)
    w3b = w3p.astype(jnp.bfloat16)

    # Weights/biases: whole arrays resident in VMEM for the entire grid.
    resident = pl.BlockSpec(memory_space=pltpu.MemorySpace.VMEM)

    probs_padded = pl.pallas_call(
        actor_kernel,
        out_shape=jax.ShapeDtypeStruct((Bp, n_pad), jnp.float32),
        grid=(Bp // tb,),
        in_specs=[
            pl.BlockSpec((tb, input_dims), lambda i: (i, 0)),   # x tiled over batch
            resident, resident,                                  # w1, b1
            resident, resident,                                  # w2, b2
            resident, resident,                                  # w3, b3
        ],
        out_specs=pl.BlockSpec((tb, n_pad), lambda i: (i, 0)),
        compiler_params=pltpu.CompilerParams(
            dimension_semantics=("parallel",)),   # megacore sharding on v7x
    )(xb, w1b, b1, w2b, b2, w3b, b3p)

    return probs_padded[:B, :n_actions]


def init_params(key, input_dims, n_actions, hidden=128):
    """Deterministic synthetic init mirroring the module's layer shapes."""
    k1, k2, k3, k4, k5, k6 = jax.random.split(key, 6)
    h2x, h = hidden * 2, hidden
    w1 = jax.random.normal(k1, (input_dims, h2x), jnp.float32) * (1.0 / jnp.sqrt(input_dims))
    b1 = jax.random.normal(k2, (1, h2x), jnp.float32) * 0.01
    w2 = jax.random.normal(k3, (h2x, h), jnp.float32) * (1.0 / jnp.sqrt(h2x))
    b2 = jax.random.normal(k4, (1, h), jnp.float32) * 0.01
    w3 = jax.random.normal(k5, (h, n_actions), jnp.float32) * (1.0 / jnp.sqrt(h))
    b3 = jax.random.normal(k6, (1, n_actions), jnp.float32) * 0.01
    return w1, b1, w2, b2, w3, b3


def reference_forward(x, w1, b1, w2, b2, w3, b3):
    h1 = jnp.maximum(x @ w1 + b1, 0.0)
    h2 = jnp.maximum(h1 @ w2 + b2, 0.0)
    logits = h2 @ w3 + b3
    return jax.nn.softmax(logits, axis=1)


if __name__ == "__main__":
    # Small shapes consistent with the module: batch=8 observations of dim 32,
    # hidden sizes fixed by the module (256, 128), 8 discrete actions.
    B, input_dims, n_actions = 8, 32, 8

    key = jax.random.PRNGKey(0)
    kx, kp = jax.random.split(key)
    x = jax.random.normal(kx, (B, input_dims), jnp.float32)
    params = init_params(kp, input_dims, n_actions)

    probs = actor_forward(x, *params)
    probs = jax.block_until_ready(probs)

    ref = reference_forward(x, *params)
    assert probs.shape == (B, n_actions)
    assert bool(jnp.all(jnp.isfinite(probs))) and bool(jnp.all(probs >= 0.0))
    # bf16 MXU operands + approx reciprocal -> relaxed tolerances vs f32 ref.
    assert jnp.allclose(probs, ref, atol=5e-2, rtol=5e-2)
    assert jnp.allclose(jnp.sum(probs, axis=1), 1.0, atol=1e-2)

    # TODO(synk): torch.distributions.Categorical itself (sampling / log_prob)
    # is distribution-object glue, not kernel compute; the probs it wraps are
    # produced here.
    print("KERNEL_OK")
</pallas_src>

<mosaic_0001>
module attributes {stable_mosaic.version = 11 : i64} {
  func.func @actor_kernel(%arg0: i32, %arg1: memref<8x32xbf16, #tpu.memory_space<vmem>>, %arg2: memref<32x256xbf16, #tpu.memory_space<vmem>>, %arg3: memref<1x256xf32, #tpu.memory_space<vmem>>, %arg4: memref<256x128xbf16, #tpu.memory_space<vmem>>, %arg5: memref<1x128xf32, #tpu.memory_space<vmem>>, %arg6: memref<128x128xbf16, #tpu.memory_space<vmem>>, %arg7: memref<1x128xf32, #tpu.memory_space<vmem>>, %arg8: memref<8x128xf32, #tpu.memory_space<vmem>>) attributes {dimension_semantics = [#tpu.dimension_semantics<parallel>], iteration_bounds = array<i64: 1>, scalar_prefetch = 0 : i64, scratch_operands = 0 : i64, tpu.core_type = #tpu.core_type<tc>, window_params = [{transform_indices = @transform_0, window_bounds = array<i64: 8, 32>}, {pipeline_mode = #tpu.pipeline_mode<synchronous>, transform_indices = @transform_1, window_bounds = array<i64: 32, 256>}, {pipeline_mode = #tpu.pipeline_mode<synchronous>, transform_indices = @transform_2, window_bounds = array<i64: 1, 256>}, {pipeline_mode = #tpu.pipeline_mode<synchronous>, transform_indices = @transform_3, window_bounds = array<i64: 256, 128>}, {pipeline_mode = #tpu.pipeline_mode<synchronous>, transform_indices = @transform_4, window_bounds = array<i64: 1, 128>}, {pipeline_mode = #tpu.pipeline_mode<synchronous>, transform_indices = @transform_5, window_bounds = array<i64: 128, 128>}, {pipeline_mode = #tpu.pipeline_mode<synchronous>, transform_indices = @transform_6, window_bounds = array<i64: 1, 128>}, {transform_indices = @transform_7, window_bounds = array<i64: 8, 128>}]} {
    %c0 = arith.constant 0 : index
    %c0_0 = arith.constant 0 : index
    %0 = vector.load %arg1[%c0, %c0_0] : memref<8x32xbf16, #tpu.memory_space<vmem>>, vector<8x32xbf16>
    %c0_1 = arith.constant 0 : index
    %c0_2 = arith.constant 0 : index
    %1 = vector.load %arg2[%c0_1, %c0_2] : memref<32x256xbf16, #tpu.memory_space<vmem>>, vector<32x256xbf16>
    %cst = arith.constant dense<0.000000e+00> : vector<8x256xf32>
    %2 = tpu.matmul %0, %1, %cst {dimension_numbers = #tpu.dot_dimension_numbers<[1], [0], [0], [1], [0, 0, 1, 1], [], []>} : vector<8x32xbf16>, vector<32x256xbf16>, vector<8x256xf32> -> vector<8x256xf32>
    %c0_3 = arith.constant 0 : index
    %c0_4 = arith.constant 0 : index
    %3 = vector.load %arg3[%c0_3, %c0_4] : memref<1x256xf32, #tpu.memory_space<vmem>>, vector<1x256xf32>
    %4 = vector.broadcast %3 : vector<1x256xf32> to vector<8x256xf32>
    %5 = arith.addf %2, %4 : vector<8x256xf32>
    %cst_5 = arith.constant 0.000000e+00 : f32
    %6 = vector.broadcast %cst_5 : f32 to vector<8x256xf32>
    %7 = arith.maximumf %5, %6 : vector<8x256xf32>
    %8 = arith.truncf %7 : vector<8x256xf32> to vector<8x256xbf16>
    %c0_6 = arith.constant 0 : index
    %c0_7 = arith.constant 0 : index
    %9 = vector.load %arg4[%c0_6, %c0_7] : memref<256x128xbf16, #tpu.memory_space<vmem>>, vector<256x128xbf16>
    %cst_8 = arith.constant dense<0.000000e+00> : vector<8x128xf32>
    %10 = tpu.matmul %8, %9, %cst_8 {dimension_numbers = #tpu.dot_dimension_numbers<[1], [0], [0], [1], [0, 0, 1, 1], [], []>} : vector<8x256xbf16>, vector<256x128xbf16>, vector<8x128xf32> -> vector<8x128xf32>
    %c0_9 = arith.constant 0 : index
    %c0_10 = arith.constant 0 : index
    %11 = vector.load %arg5[%c0_9, %c0_10] : memref<1x128xf32, #tpu.memory_space<vmem>>, vector<1x128xf32>
    %12 = vector.broadcast %11 : vector<1x128xf32> to vector<8x128xf32>
    %13 = arith.addf %10, %12 : vector<8x128xf32>
    %cst_11 = arith.constant 0.000000e+00 : f32
    %14 = vector.broadcast %cst_11 : f32 to vector<8x128xf32>
    %15 = arith.maximumf %13, %14 : vector<8x128xf32>
    %16 = arith.truncf %15 : vector<8x128xf32> to vector<8x128xbf16>
    %c0_12 = arith.constant 0 : index
    %c0_13 = arith.constant 0 : index
    %17 = vector.load %arg6[%c0_12, %c0_13] : memref<128x128xbf16, #tpu.memory_space<vmem>>, vector<128x128xbf16>
    %cst_14 = arith.constant dense<0.000000e+00> : vector<8x128xf32>
    %18 = tpu.matmul %16, %17, %cst_14 {dimension_numbers = #tpu.dot_dimension_numbers<[1], [0], [0], [1], [0, 0, 1, 1], [], []>} : vector<8x128xbf16>, vector<128x128xbf16>, vector<8x128xf32> -> vector<8x128xf32>
    %c0_15 = arith.constant 0 : index
    %c0_16 = arith.constant 0 : index
    %19 = vector.load %arg7[%c0_15, %c0_16] : memref<1x128xf32, #tpu.memory_space<vmem>>, vector<1x128xf32>
    %20 = vector.broadcast %19 : vector<1x128xf32> to vector<8x128xf32>
    %21 = arith.addf %18, %20 : vector<8x128xf32>
    %cst_17 = arith.constant dense<0xFF800000> : vector<8xf32>
    %22 = vector.multi_reduction <maximumf>, %21, %cst_17 [1] : vector<8x128xf32> to vector<8xf32>
    %23 = vector.shape_cast %22 : vector<8xf32> to vector<8x1xf32>
    %24 = vector.broadcast %23 : vector<8x1xf32> to vector<8x128xf32>
    %25 = arith.subf %21, %24 : vector<8x128xf32>
    %26 = math.exp %25 : vector<8x128xf32>
    %cst_18 = arith.constant dense<0.000000e+00> : vector<8xf32>
    %27 = vector.multi_reduction <add>, %26, %cst_18 [1] : vector<8x128xf32> to vector<8xf32>
    %28 = vector.shape_cast %27 : vector<8xf32> to vector<8x1xf32>
    %29 = tpu.reciprocal %28 {approx = true} : vector<8x1xf32> -> vector<8x1xf32>
    %30 = vector.broadcast %29 : vector<8x1xf32> to vector<8x128xf32>
    %31 = arith.mulf %26, %30 : vector<8x128xf32>
    %c0_19 = arith.constant 0 : index
    %c0_20 = arith.constant 0 : index
    %32 = vector.load %arg8[%c0_19, %c0_20] : memref<8x128xf32, #tpu.memory_space<vmem>>, vector<8x128xf32>
    tpu.vector_store %arg8[%c0_19, %c0_20], %31 {strides = array<i32>} : memref<8x128xf32, #tpu.memory_space<vmem>>, vector<8x128xf32>,
    return
  }
  func.func @transform_0(%arg0: i32) -> (i32, i32) {
    %c0_i32 = arith.constant 0 : i32
    %c0_i32_0 = arith.constant 0 : i32
    return %arg0, %c0_i32 : i32, i32
  }
  func.func @transform_1(%arg0: i32) -> (i32, i32) {
    %c0_i32 = arith.constant 0 : i32
    %c0_i32_0 = arith.constant 0 : i32
    %c0_i32_1 = arith.constant 0 : i32
    return %c0_i32, %c0_i32_0 : i32, i32
  }
  func.func @transform_2(%arg0: i32) -> (i32, i32) {
    %c0_i32 = arith.constant 0 : i32
    %c0_i32_0 = arith.constant 0 : i32
    %c0_i32_1 = arith.constant 0 : i32
    return %c0_i32, %c0_i32_0 : i32, i32
  }
  func.func @transform_3(%arg0: i32) -> (i32, i32) {
    %c0_i32 = arith.constant 0 : i32
    %c0_i32_0 = arith.constant 0 : i32
    %c0_i32_1 = arith.constant 0 : i32
    return %c0_i32, %c0_i32_0 : i32, i32
  }
  func.func @transform_4(%arg0: i32) -> (i32, i32) {
    %c0_i32 = arith.constant 0 : i32
    %c0_i32_0 = arith.constant 0 : i32
    %c0_i32_1 = arith.constant 0 : i32
    return %c0_i32, %c0_i32_0 : i32, i32
  }
  func.func @transform_5(%arg0: i32) -> (i32, i32) {
    %c0_i32 = arith.constant 0 : i32
    %c0_i32_0 = arith.constant 0 : i32
    %c0_i32_1 = arith.constant 0 : i32
    return %c0_i32, %c0_i32_0 : i32, i32
  }
  func.func @transform_6(%arg0: i32) -> (i32, i32) {
    %c0_i32 = arith.constant 0 : i32
    %c0_i32_0 = arith.constant 0 : i32
    %c0_i32_1 = arith.constant 0 : i32
    return %c0_i32, %c0_i32_0 : i32, i32
  }
  func.func @transform_7(%arg0: i32) -> (i32, i32) {
    %c0_i32 = arith.constant 0 : i32
    %c0_i32_0 = arith.constant 0 : i32
    return %arg0, %c0_i32 : i32, i32
  }
}

</mosaic_0001>

<llo_original>
// kernel: actor_forward.1
$region0: #{actor_forward.1}
  #allocation0 [shape = 'u32[]', space=smem, size = 0x4, offset = 0x4, fixed_abs, tag = 'smem constant byte address 0x4 - core index']
  #allocation1 [shape = 'u32[144,128]{1,0:T(1,128)}', space=vmem, size = 0x12000, scoped, tag = 'internal scratch']
  %s0 = inlined_call_operand.vmem [shape: bf16[8,32], index: 0, kind: input, shape index: {}]
  %s1 = inlined_call_operand.vmem [shape: bf16[32,256], index: 1, kind: input, shape index: {}]
  %s2 = inlined_call_operand.vmem [shape: f32[1,256], index: 2, kind: input, shape index: {}]
  %s3 = inlined_call_operand.vmem [shape: bf16[256,128], index: 3, kind: input, shape index: {}]
  %s4 = inlined_call_operand.vmem [shape: f32[1,128], index: 4, kind: input, shape index: {}]
  %s5 = inlined_call_operand.vmem [shape: bf16[128,128], index: 5, kind: input, shape index: {}]
  %s6 = inlined_call_operand.vmem [shape: f32[1,128], index: 6, kind: input, shape index: {}]
  %s7 = inlined_call_operand.hbm [shape: f32[8,128], index: 7, kind: output, shape index: {}]
  %s8 = sld [smem:[#allocation0]]
  $region38: #{actor_forward.1} parent=0
    _
  %s10 = ssub.s32 1, %s8
  %s11 = scalar_select 0, %s10, %s8
  $region1: #{actor_forward.1} parent=0
    #allocation2 [shape = 'u8[4096]{0}', space=vmem, size = 0x1000, scoped, tag = 'output window, operand 0, single buffered']
    #allocation3 [shape = 's32[1]{0}', space=sflag, size = 0x4, scoped, tag = 'scoped memory for actor_forward.1']
    %12 = vsyncpa [#allocation3], 0
    // Predicated region
    $region2: #{actor_forward.1} parent=1 // pred_check
      _
    $region3: #{actor_forward.1} parent=1 // pred_check_branch
      %14 = sbr.rel (0) target = $region5
    $region4: #{actor_forward.1} parent=1 // pred_region
      _
    $region5: #{actor_forward.1} parent=1 // pred_fallthru
      _
    // Predicated region
    $region6: #{actor_forward.1} parent=1 // pred_check
      _
    $region7: #{actor_forward.1} parent=1 // pred_check_branch
      %16 = sbr.rel (0) target = $region9
    $region8: #{actor_forward.1} parent=1 // pred_region
      _
    $region9: #{actor_forward.1} parent=1 // pred_fallthru
      _
    // Predicated region
    $region10: #{actor_forward.1} parent=1 // pred_check
      _
    $region11: #{actor_forward.1} parent=1 // pred_check_branch
      %18 = sbr.rel (0) target = $region13
    $region12: #{actor_forward.1} parent=1 // pred_region
      _
    $region13: #{actor_forward.1} parent=1 // pred_fallthru
      _
    // Predicated region
    $region14: #{actor_forward.1} parent=1 // pred_check
      _
    $region15: #{actor_forward.1} parent=1 // pred_check_branch
      %20 = sbr.rel (0) target = $region17
    $region16: #{actor_forward.1} parent=1 // pred_region
      _
    $region17: #{actor_forward.1} parent=1 // pred_fallthru
      _
    // Predicated region
    $region18: #{actor_forward.1} parent=1 // pred_check
      _
    $region19: #{actor_forward.1} parent=1 // pred_check_branch
      %22 = sbr.rel (0) target = $region21
    $region20: #{actor_forward.1} parent=1 // pred_region
      _
    $region21: #{actor_forward.1} parent=1 // pred_fallthru
      _
    // Predicated region
    $region22: #{actor_forward.1} parent=1 // pred_check
      _
    $region23: #{actor_forward.1} parent=1 // pred_check_branch
      %24 = sbr.rel (0) target = $region25
    $region24: #{actor_forward.1} parent=1 // pred_region
      _
    $region25: #{actor_forward.1} parent=1 // pred_fallthru
      _
    // Predicated region
    $region26: #{actor_forward.1} parent=1 // pred_check
      _
    $region27: #{actor_forward.1} parent=1 // pred_check_branch
      %26 = sbr.rel (0) target = $region29
    $region28: #{actor_forward.1} parent=1 // pred_region
      _
    $region29: #{actor_forward.1} parent=1 // pred_fallthru
      _
    %v28 = vld [vmem:[%s0] sm:$0xf]
    %v29 = vld [vmem:[%s1] sm:$0xff]
    %v30 = vld [vmem:[%s1 + $0x8] sm:$0xff]
    %v31 = vld [vmem:[%s1 + $0x10] sm:$0xff]
    %v32 = vld [vmem:[%s1 + $0x18] sm:$0xff]
    %v33 = vld [vmem:[%s2] sm:$0x3]
    %v35 = vlaneseq
    %v36 = vshrl.u32 %v35, 7
    %v37 = vsub.s32 0, %v36
    %v38 = vrot.slane %v33, %v37
    %v39 = vlaneseq
    %v40 = vshrl.u32 %v39, 7
    %v41 = vsub.s32 1, %v40
    %v42 = vrot.slane %v33, %v41
    %v49 = vunpack.c.l.b16 %v29
    %v50 = vunpack.c.h.b16 %v29
    %v51 = vunpack.c.l.b16 %v30
    %v52 = vunpack.c.h.b16 %v30
    %v53 = vunpack.c.l.b16 %v31
    %v54 = vunpack.c.h.b16 %v31
    %v55 = vunpack.c.l.b16 %v32
    %v56 = vunpack.c.h.b16 %v32
    %v57 = vpack.c.b16 %v51, %v49
    %v58 = vpack.c.b16 %v52, %v50
    %v59 = vpack.c.b16 %v55, %v53
    %v60 = vpack.c.b16 %v56, %v54
    %vm65 = vcmask 261120
    %v67 = vsel %vm65, %v28, 0
    %69 = vmatprep.subr.bf16.mxu0 0
    %70 = vmatpush1.bf16.msra.mxu0 0
    %71 = vmatprep.subr.bf16.mxu0 0
    %72 = vmatpush1.bf16.msra.mxu0 0
    %73 = vmatprep.subr.bf16.mxu0 0
    %74 = vmatpush1.bf16.msra.mxu0 0
    %75 = vmatprep.subr.bf16.mxu0 0
    %76 = vmatpush1.bf16.msra.mxu0 0
    %77 = vmatprep.subr.bf16.mxu0 0
    %78 = vmatpush1.bf16.msra.mxu0 0
    %79 = vmatprep.subr.bf16.mxu0 0
    %80 = vmatpush1.bf16.msra.mxu0 0
    %81 = vmatprep.subr.bf16.mxu0 %v60
    %82 = vmatpush1.bf16.msra.mxu0 %v59
    %83 = vmatprep.subr.bf16.mxu0 %v58
    %84 = vmatpush1.bf16.msra.mxu0 %v57
    %85 = vmatprep.subr.bf16.mxu0 0
    %86 = vmatpush2.bf16.msra.mxu0 0
    %87 = vmatprep.subr.bf16.mxu0 0
    %88 = vmatpush2.bf16.msra.mxu0 0
    %89 = vmatprep.subr.bf16.mxu0 0
    %90 = vmatpush2.bf16.msra.mxu0 0
    %91 = vmatprep.subr.bf16.mxu0 0
    %92 = vmatpush2.bf16.msra.mxu0 0
    %93 = vmatprep.subr.bf16.mxu0 0
    %94 = vmatpush2.bf16.msra.mxu0 0
    %95 = vmatprep.subr.bf16.mxu0 0
    %96 = vmatpush2.bf16.msra.mxu0 0
    %97 = vmatprep.subr.bf16.mxu0 0
    %98 = vmatpush2.bf16.msra.mxu0 0
    %99 = vmatprep.subr.bf16.mxu0 0
    %100 = vmatpush2.bf16.msra.mxu0 0
    %101 = vmatprep.mubr.bf16.mxu0 0
    %102 = vmatmul.mubr.bf16.gmra.mxu0 %v67
    %v103 = vpop.f32.mrf.mxu0
    %v104 = vadd.f32 %v38, %v103
    %v105 = vpop.f32.mrf.mxu0
    %v106 = vadd.f32 %v42, %v105
    %v107 = vpop.f32.mrf.mxu0
    %v108 = vpop.f32.mrf.mxu0
    %109 = vdwg.mxu0
    %v110 = vmax.f32 %v104, 0.0
    %v111 = vmax.f32 %v106, 0.0
    %v112 = vpack.c.bf16 %v110, %v110
    %v113 = vpack.c.bf16 %v111, %v111
    %v114 = vld [vmem:[%s3] sm:$0xf]
    %v115 = vld [vmem:[%s3 + $0x4] sm:$0xf]
    %v116 = vld [vmem:[%s3 + $0x8] sm:$0xf]
    %v117 = vld [vmem:[%s3 + $0xc] sm:$0xf]
    %v118 = vld [vmem:[%s3 + $0x10] sm:$0xf]
    %v119 = vld [vmem:[%s3 + $0x14] sm:$0xf]
    %v120 = vld [vmem:[%s3 + $0x18] sm:$0xf]
    %v121 = vld [vmem:[%s3 + $0x1c] sm:$0xf]
    %v122 = vld [vmem:[%s3 + $0x20] sm:$0xf]
    %v123 = vld [vmem:[%s3 + $0x24] sm:$0xf]
    %v124 = vld [vmem:[%s3 + $0x28] sm:$0xf]
    %v125 = vld [vmem:[%s3 + $0x2c] sm:$0xf]
    %v126 = vld [vmem:[%s3 + $0x30] sm:$0xf]
    %v127 = vld [vmem:[%s3 + $0x34] sm:$0xf]
    %v128 = vld [vmem:[%s3 + $0x38] sm:$0xf]
    %v129 = vld [vmem:[%s3 + $0x3c] sm:$0xf]
    %v130 = vld [vmem:[%s3 + $0x40] sm:$0xf]
    %v131 = vld [vmem:[%s3 + $0x44] sm:$0xf]
    %v132 = vld [vmem:[%s3 + $0x48] sm:$0xf]
    %v133 = vld [vmem:[%s3 + $0x4c] sm:$0xf]
    %v134 = vld [vmem:[%s3 + $0x50] sm:$0xf]
    %v135 = vld [vmem:[%s3 + $0x54] sm:$0xf]
    %v136 = vld [vmem:[%s3 + $0x58] sm:$0xf]
    %v137 = vld [vmem:[%s3 + $0x5c] sm:$0xf]
    %v138 = vld [vmem:[%s3 + $0x60] sm:$0xf]
    %v139 = vld [vmem:[%s3 + $0x64] sm:$0xf]
    %v140 = vld [vmem:[%s3 + $0x68] sm:$0xf]
    %v141 = vld [vmem:[%s3 + $0x6c] sm:$0xf]
    %v142 = vld [vmem:[%s3 + $0x70] sm:$0xf]
    %v143 = vld [vmem:[%s3 + $0x74] sm:$0xf]
    %v144 = vld [vmem:[%s3 + $0x78] sm:$0xf]
    %v145 = vld [vmem:[%s3 + $0x7c] sm:$0xf]
    %v146 = vld [vmem:[%s4] sm:$0x1]
    %v148 = vlaneseq
    %v149 = vshrl.u32 %v148, 7
    %v150 = vsub.s32 0, %v149
    %v151 = vrot.slane %v146, %v150
    %v185 = vunpack.c.l.b16 %v114
    %v186 = vunpack.c.l.b16 %v115
    %v187 = vunpack.c.l.b16 %v116
    %v188 = vunpack.c.l.b16 %v117
    %v189 = vunpack.c.l.b16 %v118
    %v190 = vunpack.c.l.b16 %v119
    %v191 = vunpack.c.l.b16 %v120
    %v192 = vunpack.c.l.b16 %v121
    %v193 = vunpack.c.l.b16 %v122
    %v194 = vunpack.c.l.b16 %v123
    %v195 = vunpack.c.l.b16 %v124
    %v196 = vunpack.c.l.b16 %v125
    %v197 = vunpack.c.l.b16 %v126
    %v198 = vunpack.c.l.b16 %v127
    %v199 = vunpack.c.l.b16 %v128
    %v200 = vunpack.c.l.b16 %v129
    %v201 = vunpack.c.l.b16 %v130
    %v202 = vunpack.c.l.b16 %v131
    %v203 = vunpack.c.l.b16 %v132
    %v204 = vunpack.c.l.b16 %v133
    %v205 = vunpack.c.l.b16 %v134
    %v206 = vunpack.c.l.b16 %v135
    %v207 = vunpack.c.l.b16 %v136
    %v208 = vunpack.c.l.b16 %v137
    %v209 = vunpack.c.l.b16 %v138
    %v210 = vunpack.c.l.b16 %v139
    %v211 = vunpack.c.l.b16 %v140
    %v212 = vunpack.c.l.b16 %v141
    %v213 = vunpack.c.l.b16 %v142
    %v214 = vunpack.c.l.b16 %v143
    %v215 = vunpack.c.l.b16 %v144
    %v216 = vunpack.c.l.b16 %v145
    %v217 = vpack.c.b16 %v186, %v185
    %v218 = vpack.c.b16 %v188, %v187
    %v219 = vpack.c.b16 %v190, %v189
    %v220 = vpack.c.b16 %v192, %v191
    %v221 = vpack.c.b16 %v194, %v193
    %v222 = vpack.c.b16 %v196, %v195
    %v223 = vpack.c.b16 %v198, %v197
    %v224 = vpack.c.b16 %v200, %v199
    %v225 = vpack.c.b16 %v202, %v201
    %v226 = vpack.c.b16 %v204, %v203
    %v227 = vpack.c.b16 %v206, %v205
    %v228 = vpack.c.b16 %v208, %v207
    %v229 = vpack.c.b16 %v210, %v209
    %v230 = vpack.c.b16 %v212, %v211
    %v231 = vpack.c.b16 %v214, %v213
    %v232 = vpack.c.b16 %v216, %v215
    %249 = vmatprep.subr.bf16.mxu0 0
    %250 = vmatpush1.bf16.msra.mxu0 %v224
    %251 = vmatprep.subr.bf16.mxu0 0
    %252 = vmatpush1.bf16.msra.mxu0 %v223
    %253 = vmatprep.subr.bf16.mxu0 0
    %254 = vmatpush1.bf16.msra.mxu0 %v222
    %255 = vmatprep.subr.bf16.mxu0 0
    %256 = vmatpush1.bf16.msra.mxu0 %v221
    %257 = vmatprep.subr.bf16.mxu0 0
    %258 = vmatpush1.bf16.msra.mxu0 %v220
    %259 = vmatprep.subr.bf16.mxu0 0
    %260 = vmatpush1.bf16.msra.mxu0 %v219
    %261 = vmatprep.subr.bf16.mxu0 0
    %262 = vmatpush1.bf16.msra.mxu0 %v218
    %263 = vmatprep.subr.bf16.mxu0 0
    %264 = vmatpush1.bf16.msra.mxu0 %v217
    %265 = vmatprep.subr.bf16.mxu0 0
    %266 = vmatpush2.bf16.msra.mxu0 %v232
    %267 = vmatprep.subr.bf16.mxu0 0
    %268 = vmatpush2.bf16.msra.mxu0 %v231
    %269 = vmatprep.subr.bf16.mxu0 0
    %270 = vmatpush2.bf16.msra.mxu0 %v230
    %271 = vmatprep.subr.bf16.mxu0 0
    %272 = vmatpush2.bf16.msra.mxu0 %v229
    %273 = vmatprep.subr.bf16.mxu0 0
    %274 = vmatpush2.bf16.msra.mxu0 %v228
    %275 = vmatprep.subr.bf16.mxu0 0
    %276 = vmatpush2.bf16.msra.mxu0 %v227
    %277 = vmatprep.subr.bf16.mxu0 0
    %278 = vmatpush2.bf16.msra.mxu0 %v226
    %279 = vmatprep.subr.bf16.mxu0 0
    %280 = vmatpush2.bf16.msra.mxu0 %v225
    %281 = vmatprep.mubr.bf16.mxu0 %v113
    %282 = vmatmul.mubr.bf16.gmra.mxu0 %v112
    %v283 = vpop.f32.mrf.mxu0
    %v284 = vadd.f32 %v151, %v283
    %v285 = vpop.f32.mrf.mxu0
    %v286 = vpop.f32.mrf.mxu0
    %v287 = vpop.f32.mrf.mxu0
    %288 = vdwg.mxu0
    %v289 = vmax.f32 %v284, 0.0
    %v290 = vpack.c.bf16 %v289, %v289
    %v291 = vld [vmem:[%s5] sm:$0xf]
    %v292 = vld [vmem:[%s5 + $0x4] sm:$0xf]
    %v293 = vld [vmem:[%s5 + $0x8] sm:$0xf]
    %v294 = vld [vmem:[%s5 + $0xc] sm:$0xf]
    %v295 = vld [vmem:[%s5 + $0x10] sm:$0xf]
    %v296 = vld [vmem:[%s5 + $0x14] sm:$0xf]
    %v297 = vld [vmem:[%s5 + $0x18] sm:$0xf]
    %v298 = vld [vmem:[%s5 + $0x1c] sm:$0xf]
    %v299 = vld [vmem:[%s5 + $0x20] sm:$0xf]
    %v300 = vld [vmem:[%s5 + $0x24] sm:$0xf]
    %v301 = vld [vmem:[%s5 + $0x28] sm:$0xf]
    %v302 = vld [vmem:[%s5 + $0x2c] sm:$0xf]
    %v303 = vld [vmem:[%s5 + $0x30] sm:$0xf]
    %v304 = vld [vmem:[%s5 + $0x34] sm:$0xf]
    %v305 = vld [vmem:[%s5 + $0x38] sm:$0xf]
    %v306 = vld [vmem:[%s5 + $0x3c] sm:$0xf]
    %v307 = vld [vmem:[%s6] sm:$0x1]
    %v309 = vlaneseq
    %v310 = vshrl.u32 %v309, 7
    %v311 = vsub.s32 0, %v310
    %v312 = vrot.slane %v307, %v311
    %v330 = vunpack.c.l.b16 %v291
    %v331 = vunpack.c.l.b16 %v292
    %v332 = vunpack.c.l.b16 %v293
    %v333 = vunpack.c.l.b16 %v294
    %v334 = vunpack.c.l.b16 %v295
    %v335 = vunpack.c.l.b16 %v296
    %v336 = vunpack.c.l.b16 %v297
    %v337 = vunpack.c.l.b16 %v298
    %v338 = vunpack.c.l.b16 %v299
    %v339 = vunpack.c.l.b16 %v300
    %v340 = vunpack.c.l.b16 %v301
    %v341 = vunpack.c.l.b16 %v302
    %v342 = vunpack.c.l.b16 %v303
    %v343 = vunpack.c.l.b16 %v304
    %v344 = vunpack.c.l.b16 %v305
    %v345 = vunpack.c.l.b16 %v306
    %v346 = vpack.c.b16 %v331, %v330
    %v347 = vpack.c.b16 %v333, %v332
    %v348 = vpack.c.b16 %v335, %v334
    %v349 = vpack.c.b16 %v337, %v336
    %v350 = vpack.c.b16 %v339, %v338
    %v351 = vpack.c.b16 %v341, %v340
    %v352 = vpack.c.b16 %v343, %v342
    %v353 = vpack.c.b16 %v345, %v344
    %362 = vmatprep.subr.bf16.mxu0 0
    %363 = vmatpush1.bf16.msra.mxu0 %v353
    %364 = vmatprep.subr.bf16.mxu0 0
    %365 = vmatpush1.bf16.msra.mxu0 %v352
    %366 = vmatprep.subr.bf16.mxu0 0
    %367 = vmatpush1.bf16.msra.mxu0 %v351
    %368 = vmatprep.subr.bf16.mxu0 0
    %369 = vmatpush1.bf16.msra.mxu0 %v350
    %370 = vmatprep.subr.bf16.mxu0 0
    %371 = vmatpush1.bf16.msra.mxu0 %v349
    %372 = vmatprep.subr.bf16.mxu0 0
    %373 = vmatpush1.bf16.msra.mxu0 %v348
    %374 = vmatprep.subr.bf16.mxu0 0
    %375 = vmatpush1.bf16.msra.mxu0 %v347
    %376 = vmatprep.subr.bf16.mxu0 0
    %377 = vmatpush1.bf16.msra.mxu0 %v346
    %378 = vmatprep.subr.bf16.mxu0 0
    %379 = vmatpush2.bf16.msra.mxu0 0
    %380 = vmatprep.subr.bf16.mxu0 0
    %381 = vmatpush2.bf16.msra.mxu0 0
    %382 = vmatprep.subr.bf16.mxu0 0
    %383 = vmatpush2.bf16.msra.mxu0 0
    %384 = vmatprep.subr.bf16.mxu0 0
    %385 = vmatpush2.bf16.msra.mxu0 0
    %386 = vmatprep.subr.bf16.mxu0 0
    %387 = vmatpush2.bf16.msra.mxu0 0
    %388 = vmatprep.subr.bf16.mxu0 0
    %389 = vmatpush2.bf16.msra.mxu0 0
    %390 = vmatprep.subr.bf16.mxu0 0
    %391 = vmatpush2.bf16.msra.mxu0 0
    %392 = vmatprep.subr.bf16.mxu0 0
    %393 = vmatpush2.bf16.msra.mxu0 0
    %394 = vmatprep.mubr.bf16.mxu0 0
    %395 = vmatmul.mubr.bf16.gmra.mxu0 %v290
    %v396 = vpop.f32.mrf.mxu0
    %v397 = vadd.f32 %v312, %v396
    %v398 = vpop.f32.mrf.mxu0
    %v399 = vpop.f32.mrf.mxu0
    %v400 = vpop.f32.mrf.mxu0
    %401 = vdwg.mxu0
    %402 = vmax.xlane.f32.xlu0 %v397
    %v403 = vpop.xlane.xlu0 %402
    %v404 = vsub.f32 %v397, %v403
    %v405 = vmul.f32 %v404, 1.442695
    %v406 = vpow.pop %v405
    %407 = vadd.xlane.f32.xlu0 %v406
    %v408 = vpop.xlane.xlu0 %407
    %v409 = vrcp.pop %v408
    %v410 = vmul.f32 %v406, %v409
    %411 = vst [vmem:[#allocation2] sm:$0xff] %v410
    // Predicated region
    $region30: #{actor_forward.1} parent=1 // pred_check
      _
    $region31: #{actor_forward.1} parent=1 // pred_check_branch
      %413 = sbr.rel (0) target = $region33
    $region32: #{actor_forward.1} parent=1 // pred_region
      %s415 = ssub.s32 128, 128
      %416 = vsyncadd [#allocation3], %s415
      %s418 = sshll.u32 [#allocation2], 4
      %s419 = int_to_ptr.vmem [resolvable:$true] %s418
      %421 = dma.vmem_to_hbm [thread:$0]  %s419, 128, %s7, [#allocation3]
    $region33: #{actor_forward.1} parent=1 // pred_fallthru
      _
    // Predicated region
    $region34: #{actor_forward.1} parent=1 // pred_check
      _
    $region35: #{actor_forward.1} parent=1 // pred_check_branch
      %423 = sbr.rel (0) target = $region37
    $region36: #{actor_forward.1} parent=1 // pred_region
      %424 = dma.done [#allocation3], 128
    $region37: #{actor_forward.1} parent=1 // pred_fallthru
      _
    %425 = vsyncpa [#allocation3], 1

</llo_original>
